<compile_context>
chip_gen: v7x
topology: tpu7x:2x2x1
jax: 0.10.0
libtpu: 0.0.40
codegen_flags: <defaults>
</compile_context>

<pallas_src>
import functools

import jax
import jax.numpy as jnp
from jax.experimental import pallas as pl
from jax.experimental.pallas import tpu as pltpu


def _gan_loss_kernel(rend_ref, real_ref, w_ref, out_ref, acc_ref, *, inv_t):
    """grid = (batch slabs [parallel], F lane-tiles [arbitrary / reduction]).

    Block = (b_blk, T, f_tile): every trained frame of the batch slab, one lane
    tile of the flattened frame.  Per step: diff = real - fake (VPU), sum over
    frames (hoisted), then one lane-dense projection against w.  The bias
    cancels in D(real) - D(fake) and never enters the kernel.
    """
    f = pl.program_id(1)

    @pl.when(f == 0)
    def _():
        acc_ref[...] = jnp.zeros_like(acc_ref)

    # Upcast to f32 before arithmetic (v5e VPU has no bf16); accumulate in f32.
    diff = real_ref[...].astype(jnp.float32) - rend_ref[...].astype(jnp.float32)
    frame_sum = jnp.sum(diff, axis=1)                      # (b_blk, f_tile)
    w = w_ref[...].astype(jnp.float32)                     # (1, f_tile) lane-dense
    acc_ref[...] += jnp.sum(frame_sum * w, axis=-1, keepdims=True)  # (b_blk, 1)

    @pl.when(f == pl.num_programs(1) - 1)
    def _():
        out_ref[...] = acc_ref[...] * inv_t


def gan_loss_pallas(renders, hs_frames, disc_w, disc_b, fmo_train_steps,
                    *, compute_dtype=jnp.bfloat16,
                    max_vmem_bytes=32 * 1024 * 1024):
    """renders: (B, T_total, C_r, H, W), hs_frames: (B, >=T, 4, H, W).

    Returns (gen_loss, disc_loss), each of shape (B, 1)   (reduction == 'none').
    """
    assert renders.shape[0] == hs_frames.shape[0], \
        "predict & target batch size don't match"
    T = int(fmo_train_steps)
    B = renders.shape[0]
    renders = renders[:, :T, :4]
    assert hs_frames.shape[1] >= T
    assert hs_frames.shape[2:] == renders.shape[2:], \
        "real / fake frames must flatten to the same feature size"
    C, H, W = renders.shape[2:]
    F = C * H * W
    assert F % 128 == 0, "flattened frame size must be a multiple of 128 lanes"

    # Layout-preserving reshapes only (no frame-major transpose): (B, T, F),
    # fed as bf16 -- the kernel is HBM-bandwidth bound, so halve the bytes.
    rend = renders.reshape(B, T, F).astype(compute_dtype)
    real = hs_frames[:, :T].reshape(B, T, F).astype(compute_dtype)
    # Lane-dense (1, F) weight instead of an (F, 1) N=1 matmul operand.
    w = disc_w.reshape(1, F).astype(compute_dtype)
    del disc_b  # bias cancels in D(real) - D(fake); dead weight

    itemsize = jnp.dtype(compute_dtype).itemsize

    # Batch slab: split across v7x's two TensorCores when B is large enough to
    # keep the (8, 128) sublane constraint; harmless single slab otherwise.
    b_blk = B // 2 if (B % 16 == 0) else B
    n_b = B // b_blk

    # Lane tile over F: largest multiple-of-128 divisor of F whose
    # double-buffered input blocks (2 inputs x 2 buffers) fit the VMEM budget.
    def _fits(f_tile):
        return 2 * 2 * b_blk * T * f_tile * itemsize <= max_vmem_bytes

    f_tile = 128
    for d in range(1, F // 128 + 1):
        if (F // 128) % d == 0 and _fits(d * 128):
            f_tile = d * 128
    n_f = F // f_tile
    # TODO(synk): if even (b_blk, T, 128) overflows VMEM (huge fmo_train_steps),
    # add a T chunk axis as well; not needed for realistic frame counts.

    kernel = functools.partial(_gan_loss_kernel, inv_t=1.0 / T)
    gen_loss = pl.pallas_call(
        kernel,
        out_shape=jax.ShapeDtypeStruct((B, 1), jnp.float32),
        grid_spec=pltpu.PrefetchScalarGridSpec(
            num_scalar_prefetch=0,
            grid=(n_b, n_f),
            in_specs=[
                pl.BlockSpec((b_blk, T, f_tile), lambda b, f: (b, 0, f)),  # fake
                pl.BlockSpec((b_blk, T, f_tile), lambda b, f: (b, 0, f)),  # real
                pl.BlockSpec((1, f_tile), lambda b, f: (0, f)),            # disc W
            ],
            out_specs=pl.BlockSpec((b_blk, 1), lambda b, f: (b, 0)),
            scratch_shapes=[pltpu.VMEM((b_blk, 1), jnp.float32)],
        ),
        compiler_params=pltpu.CompilerParams(
            dimension_semantics=("parallel", "arbitrary"),  # F is the reduction
            vmem_limit_bytes=48 * 1024 * 1024,
        ),
    )(rend, real, w)

    disc_loss = -gen_loss              # trivial elementwise, kept in glue
    return gen_loss, disc_loss         # reduction == 'none'


def _reference(renders, hs_frames, w, b, T, cast_dtype=None):
    """Pure-JAX mirror of the PyTorch loop with the linear discriminator."""
    renders = renders[:, :T, :4]
    hs = hs_frames[:, :T]
    if cast_dtype is not None:         # match the kernel's input rounding
        renders = renders.astype(cast_dtype).astype(jnp.float32)
        hs = hs.astype(cast_dtype).astype(jnp.float32)
        w = w.astype(cast_dtype).astype(jnp.float32)
    B = renders.shape[0]
    gen = jnp.zeros((B, 1), jnp.float32)
    for t in range(T):
        real_out = hs[:, t].reshape(B, -1) @ w + b
        fake_out = renders[:, t].reshape(B, -1) @ w + b
        gen = gen + (real_out - fake_out)
    gen = gen / T
    return gen, -gen


if __name__ == "__main__":
    key = jax.random.PRNGKey(0)
    k1, k2, k3, k4 = jax.random.split(key, 4)

    B, T_total, fmo_train_steps = 2, 4, 3
    C_render, C, H, W = 5, 4, 16, 16        # renders has >4 channels; [:4] applies
    F = C * H * W

    renders = jax.random.normal(k1, (B, T_total, C_render, H, W), jnp.float32)
    hs_frames = jax.random.normal(k2, (B, fmo_train_steps, C, H, W), jnp.float32)

    # Deterministic synthetic discriminator parameters (Linear: F -> 1).
    disc_w = jax.random.normal(k3, (F, 1), jnp.float32) * 0.02
    disc_b = jax.random.normal(k4, (1,), jnp.float32)

    # Path 1: everything fits in VMEM -> single grid step over F.
    gen_loss, disc_loss = gan_loss_pallas(
        renders, hs_frames, disc_w, disc_b, fmo_train_steps)
    # Path 2: force the F-tiled accumulation path (128-lane tiles, 8 steps).
    gen_loss_t, disc_loss_t = gan_loss_pallas(
        renders, hs_frames, disc_w, disc_b, fmo_train_steps,
        max_vmem_bytes=4 * 1024)
    jax.block_until_ready((gen_loss, disc_loss, gen_loss_t, disc_loss_t))

    # Reference with the same bf16 input rounding as the kernel (tight check).
    ref_gen, ref_disc = _reference(renders, hs_frames, disc_w,
                                   disc_b.reshape(1, 1), fmo_train_steps,
                                   cast_dtype=jnp.bfloat16)
    assert jnp.allclose(gen_loss, ref_gen, atol=1e-3, rtol=1e-3)
    assert jnp.allclose(disc_loss, ref_disc, atol=1e-3, rtol=1e-3)
    assert jnp.allclose(gen_loss_t, ref_gen, atol=1e-3, rtol=1e-3)
    assert jnp.allclose(disc_loss_t, ref_disc, atol=1e-3, rtol=1e-3)

    # Sanity vs the full-f32 reference (loose: bf16 inputs).
    f32_gen, f32_disc = _reference(renders, hs_frames, disc_w,
                                   disc_b.reshape(1, 1), fmo_train_steps)
    assert jnp.allclose(gen_loss, f32_gen, atol=5e-2, rtol=5e-2)
    assert jnp.allclose(disc_loss, f32_disc, atol=5e-2, rtol=5e-2)

    print("KERNEL_OK")
</pallas_src>

<mosaic_0001>
module attributes {stable_mosaic.version = 11 : i64} {
  func.func @_gan_loss_kernel(%arg0: i32, %arg1: i32, %arg2: memref<2x3x1024xbf16, #tpu.memory_space<vmem>>, %arg3: memref<2x3x1024xbf16, #tpu.memory_space<vmem>>, %arg4: memref<1x1024xbf16, #tpu.memory_space<vmem>>, %arg5: memref<2x1xf32, #tpu.memory_space<vmem>>, %arg6: memref<2x1xf32, #tpu.memory_space<vmem>>) attributes {dimension_semantics = [#tpu.dimension_semantics<parallel>, #tpu.dimension_semantics<arbitrary>], iteration_bounds = array<i64: 1, 1>, scalar_prefetch = 0 : i64, scratch_operands = 1 : i64, tpu.core_type = #tpu.core_type<tc>, window_params = [{transform_indices = @transform_0, window_bounds = array<i64: 2, 3, 1024>}, {transform_indices = @transform_1, window_bounds = array<i64: 2, 3, 1024>}, {transform_indices = @transform_2, window_bounds = array<i64: 1, 1024>}, {transform_indices = @transform_3, window_bounds = array<i64: 2, 1>}]} {
    %c0_i32 = arith.constant 0 : i32
    %0 = arith.cmpi eq, %arg1, %c0_i32 : i32
    %1 = arith.extui %0 : i1 to i32
    %c0_i32_0 = arith.constant 0 : i32
    %2 = arith.cmpi ne, %1, %c0_i32_0 : i32
    scf.if %2 {
      %cst_15 = arith.constant 0.000000e+00 : f32
      %21 = vector.broadcast %cst_15 : f32 to vector<2x1xf32>
      %c0_16 = arith.constant 0 : index
      %c0_17 = arith.constant 0 : index
      %22 = vector.load %arg6[%c0_16, %c0_17] : memref<2x1xf32, #tpu.memory_space<vmem>>, vector<2x1xf32>
      tpu.vector_store %arg6[%c0_16, %c0_17], %21 {strides = array<i32>} : memref<2x1xf32, #tpu.memory_space<vmem>>, vector<2x1xf32>,
    } else {
    }
    %c0 = arith.constant 0 : index
    %c0_1 = arith.constant 0 : index
    %c0_2 = arith.constant 0 : index
    %3 = vector.load %arg3[%c0, %c0_1, %c0_2] : memref<2x3x1024xbf16, #tpu.memory_space<vmem>>, vector<2x3x1024xbf16>
    %4 = arith.extf %3 : vector<2x3x1024xbf16> to vector<2x3x1024xf32>
    %c0_3 = arith.constant 0 : index
    %c0_4 = arith.constant 0 : index
    %c0_5 = arith.constant 0 : index
    %5 = vector.load %arg2[%c0_3, %c0_4, %c0_5] : memref<2x3x1024xbf16, #tpu.memory_space<vmem>>, vector<2x3x1024xbf16>
    %6 = arith.extf %5 : vector<2x3x1024xbf16> to vector<2x3x1024xf32>
    %7 = arith.subf %4, %6 : vector<2x3x1024xf32>
    %cst = arith.constant dense<0.000000e+00> : vector<2x1024xf32>
    %8 = vector.multi_reduction <add>, %7, %cst [1] : vector<2x3x1024xf32> to vector<2x1024xf32>
    %c0_6 = arith.constant 0 : index
    %c0_7 = arith.constant 0 : index
    %9 = vector.load %arg4[%c0_6, %c0_7] : memref<1x1024xbf16, #tpu.memory_space<vmem>>, vector<1x1024xbf16>
    %10 = arith.extf %9 : vector<1x1024xbf16> to vector<1x1024xf32>
    %c0_8 = arith.constant 0 : index
    %c0_9 = arith.constant 0 : index
    %11 = vector.load %arg6[%c0_8, %c0_9] : memref<2x1xf32, #tpu.memory_space<vmem>>, vector<2x1xf32>
    %12 = vector.broadcast %10 : vector<1x1024xf32> to vector<2x1024xf32>
    %13 = arith.mulf %8, %12 : vector<2x1024xf32>
    %cst_10 = arith.constant dense<0.000000e+00> : vector<2xf32>
    %14 = vector.multi_reduction <add>, %13, %cst_10 [1] : vector<2x1024xf32> to vector<2xf32>
    %15 = vector.shape_cast %14 : vector<2xf32> to vector<2x1xf32>
    %16 = arith.addf %11, %15 : vector<2x1xf32>
    %c0_11 = arith.constant 0 : index
    %c0_12 = arith.constant 0 : index
    %17 = vector.load %arg6[%c0_11, %c0_12] : memref<2x1xf32, #tpu.memory_space<vmem>>, vector<2x1xf32>
    tpu.vector_store %arg6[%c0_11, %c0_12], %16 {strides = array<i32>} : memref<2x1xf32, #tpu.memory_space<vmem>>, vector<2x1xf32>,
    %c0_i32_13 = arith.constant 0 : i32
    %18 = arith.cmpi eq, %arg1, %c0_i32_13 : i32
    %19 = arith.extui %18 : i1 to i32
    %c0_i32_14 = arith.constant 0 : i32
    %20 = arith.cmpi ne, %19, %c0_i32_14 : i32
    scf.if %20 {
      %c0_15 = arith.constant 0 : index
      %c0_16 = arith.constant 0 : index
      %21 = vector.load %arg6[%c0_15, %c0_16] : memref<2x1xf32, #tpu.memory_space<vmem>>, vector<2x1xf32>
      %cst_17 = arith.constant 0.333333343 : f32
      %22 = vector.broadcast %cst_17 : f32 to vector<2x1xf32>
      %23 = arith.mulf %21, %22 : vector<2x1xf32>
      %c0_18 = arith.constant 0 : index
      %c0_19 = arith.constant 0 : index
      %24 = vector.load %arg5[%c0_18, %c0_19] : memref<2x1xf32, #tpu.memory_space<vmem>>, vector<2x1xf32>
      tpu.vector_store %arg5[%c0_18, %c0_19], %23 {strides = array<i32>} : memref<2x1xf32, #tpu.memory_space<vmem>>, vector<2x1xf32>,
    } else {
    }
    return
  }
  func.func @transform_0(%arg0: i32, %arg1: i32) -> (i32, i32, i32) {
    %c0_i32 = arith.constant 0 : i32
    %c0_i32_0 = arith.constant 0 : i32
    return %arg0, %c0_i32, %arg1 : i32, i32, i32
  }
  func.func @transform_1(%arg0: i32, %arg1: i32) -> (i32, i32, i32) {
    %c0_i32 = arith.constant 0 : i32
    %c0_i32_0 = arith.constant 0 : i32
    return %arg0, %c0_i32, %arg1 : i32, i32, i32
  }
  func.func @transform_2(%arg0: i32, %arg1: i32) -> (i32, i32) {
    %c0_i32 = arith.constant 0 : i32
    %c0_i32_0 = arith.constant 0 : i32
    return %c0_i32, %arg1 : i32, i32
  }
  func.func @transform_3(%arg0: i32, %arg1: i32) -> (i32, i32) {
    %c0_i32 = arith.constant 0 : i32
    %c0_i32_0 = arith.constant 0 : i32
    return %arg0, %c0_i32 : i32, i32
  }
}

</mosaic_0001>

<llo_original>
// kernel: tpu_custom_call.1
$region0: #{tpu_custom_call.1}
  #allocation0 [shape = 'u32[]', space=smem, size = 0x4, offset = 0x4, fixed_abs, tag = 'smem constant byte address 0x4 - core index']
  #allocation1 [shape = 'u32[144,128]{1,0:T(1,128)}', space=vmem, size = 0x12000, scoped, tag = 'internal scratch']
  #allocation2 [shape = 'f32[2,1]{1,0:T(2,128)}', space=vmem, size = 0x400, scoped, tag = 'scratch operand']
  %s0 = inlined_call_operand.vmem [shape: bf16[2,3,1024], index: 0, kind: input, shape index: {}]
  %s1 = inlined_call_operand.vmem [shape: bf16[2,3,1024], index: 1, kind: input, shape index: {}]
  %s2 = inlined_call_operand.vmem [shape: bf16[1,1024], index: 2, kind: input, shape index: {}]
  %s3 = inlined_call_operand.vmem [shape: f32[2,1], index: 3, kind: output, shape index: {}]
  %s4 = sld [smem:[#allocation0]]
  $region30: #{tpu_custom_call.1} parent=0
    _
  %s6 = ssub.s32 1, %s4
  %s7 = scalar_select 0, %s6, %s4
  // Predicated region
  $region2: #{tpu_custom_call.1} parent=0 // pred_check
    _
  $region3: #{tpu_custom_call.1} parent=0 // pred_check_branch
    %9 = sbr.rel (0) target = $region5
  $region4: #{tpu_custom_call.1} parent=0 // pred_region
    _
  $region5: #{tpu_custom_call.1} parent=0 // pred_fallthru
    _
  // Predicated region
  $region6: #{tpu_custom_call.1} parent=0 // pred_check
    _
  $region7: #{tpu_custom_call.1} parent=0 // pred_check_branch
    %11 = sbr.rel (0) target = $region9
  $region8: #{tpu_custom_call.1} parent=0 // pred_region
    _
  $region9: #{tpu_custom_call.1} parent=0 // pred_fallthru
    _
  // Predicated region
  $region10: #{tpu_custom_call.1} parent=0 // pred_check
    _
  $region11: #{tpu_custom_call.1} parent=0 // pred_check_branch
    %13 = sbr.rel (0) target = $region13
  $region12: #{tpu_custom_call.1} parent=0 // pred_region
    _
  $region13: #{tpu_custom_call.1} parent=0 // pred_fallthru
    _
  %p14 = scmp.eq.s32.totalorder 0, 0
  // Predicated region
  $region14: #{tpu_custom_call.1} parent=0 // pred_check
    %p15 = pneg %p14
  $region15: #{tpu_custom_call.1} parent=0 // pred_check_branch
    %17 = sbr.rel (%p15) target = $region17
  $region16: #{tpu_custom_call.1} parent=0 // pred_region
    %vm18 = vcmask 1024
    %19 = vst.msk [vmem:[#allocation2] sm:$0x3] %vm18, 0.0
  $region17: #{tpu_custom_call.1} parent=0 // pred_fallthru
    _
  %v20 = vld [vmem:[%s1] sm:$0xff]
  %v21 = vld [vmem:[%s1 + $0x8] sm:$0xff]
  %v22 = vld [vmem:[%s1 + $0x10] sm:$0xff]
  %v23 = vld [vmem:[%s1 + $0x18] sm:$0xff]
  %v24 = vunpack.c.l.bf16 %v20
  %v25 = vunpack.c.h.bf16 %v20
  %v26 = vunpack.c.l.bf16 %v21
  %v27 = vunpack.c.h.bf16 %v21
  %v28 = vunpack.c.l.bf16 %v22
  %v29 = vunpack.c.h.bf16 %v22
  %v30 = vunpack.c.l.bf16 %v23
  %v31 = vunpack.c.h.bf16 %v23
  %v32 = vld [vmem:[%s0] sm:$0xff]
  %v33 = vld [vmem:[%s0 + $0x8] sm:$0xff]
  %v34 = vld [vmem:[%s0 + $0x10] sm:$0xff]
  %v35 = vld [vmem:[%s0 + $0x18] sm:$0xff]
  %v36 = vunpack.c.l.bf16 %v32
  %v37 = vunpack.c.h.bf16 %v32
  %v38 = vunpack.c.l.bf16 %v33
  %v39 = vunpack.c.h.bf16 %v33
  %v40 = vunpack.c.l.bf16 %v34
  %v41 = vunpack.c.h.bf16 %v34
  %v42 = vunpack.c.l.bf16 %v35
  %v43 = vunpack.c.h.bf16 %v35
  %v44 = vsub.f32 %v24, %v36
  %v45 = vsub.f32 %v25, %v37
  %v46 = vsub.f32 %v26, %v38
  %v47 = vsub.f32 %v27, %v39
  %v48 = vsub.f32 %v28, %v40
  %v49 = vsub.f32 %v29, %v41
  %v50 = vsub.f32 %v30, %v42
  %v51 = vsub.f32 %v31, %v43
  %v60 = vcombine.high %v44, %v44
  %v61 = vcombine.high %v45, %v45
  %v62 = vcombine.high %v46, %v46
  %v63 = vcombine.high %v47, %v47
  %v64 = vcombine.high %v48, %v48
  %v65 = vcombine.high %v49, %v49
  %v66 = vcombine.high %v50, %v50
  %v67 = vcombine.high %v51, %v51
  %vm76 = vcmask 1042432
  %v77 = vsel %vm76, %v44, 0.0
  %v78 = vrot.slane %v77, 4
  %v79 = vadd.f32 %v77, %v78
  %v80 = vrot.slane %v79, 2
  %v81 = vadd.f32 %v79, %v80
  %v82 = vrot.slane %v81, 1
  %v83 = vadd.f32 %v81, %v82
  %v84 = vsel %vm76, %v60, 0.0
  %v85 = vrot.slane %v84, 4
  %v86 = vadd.f32 %v84, %v85
  %v87 = vrot.slane %v86, 2
  %v88 = vadd.f32 %v86, %v87
  %v89 = vrot.slane %v88, 1
  %v90 = vadd.f32 %v88, %v89
  %v91 = vsel %vm76, %v45, 0.0
  %v92 = vrot.slane %v91, 4
  %v93 = vadd.f32 %v91, %v92
  %v94 = vrot.slane %v93, 2
  %v95 = vadd.f32 %v93, %v94
  %v96 = vrot.slane %v95, 1
  %v97 = vadd.f32 %v95, %v96
  %v98 = vsel %vm76, %v61, 0.0
  %v99 = vrot.slane %v98, 4
  %v100 = vadd.f32 %v98, %v99
  %v101 = vrot.slane %v100, 2
  %v102 = vadd.f32 %v100, %v101
  %v103 = vrot.slane %v102, 1
  %v104 = vadd.f32 %v102, %v103
  %v105 = vsel %vm76, %v46, 0.0
  %v106 = vrot.slane %v105, 4
  %v107 = vadd.f32 %v105, %v106
  %v108 = vrot.slane %v107, 2
  %v109 = vadd.f32 %v107, %v108
  %v110 = vrot.slane %v109, 1
  %v111 = vadd.f32 %v109, %v110
  %v112 = vsel %vm76, %v62, 0.0
  %v113 = vrot.slane %v112, 4
  %v114 = vadd.f32 %v112, %v113
  %v115 = vrot.slane %v114, 2
  %v116 = vadd.f32 %v114, %v115
  %v117 = vrot.slane %v116, 1
  %v118 = vadd.f32 %v116, %v117
  %v119 = vsel %vm76, %v47, 0.0
  %v120 = vrot.slane %v119, 4
  %v121 = vadd.f32 %v119, %v120
  %v122 = vrot.slane %v121, 2
  %v123 = vadd.f32 %v121, %v122
  %v124 = vrot.slane %v123, 1
  %v125 = vadd.f32 %v123, %v124
  %v126 = vsel %vm76, %v63, 0.0
  %v127 = vrot.slane %v126, 4
  %v128 = vadd.f32 %v126, %v127
  %v129 = vrot.slane %v128, 2
  %v130 = vadd.f32 %v128, %v129
  %v131 = vrot.slane %v130, 1
  %v132 = vadd.f32 %v130, %v131
  %v133 = vsel %vm76, %v48, 0.0
  %v134 = vrot.slane %v133, 4
  %v135 = vadd.f32 %v133, %v134
  %v136 = vrot.slane %v135, 2
  %v137 = vadd.f32 %v135, %v136
  %v138 = vrot.slane %v137, 1
  %v139 = vadd.f32 %v137, %v138
  %v140 = vsel %vm76, %v64, 0.0
  %v141 = vrot.slane %v140, 4
  %v142 = vadd.f32 %v140, %v141
  %v143 = vrot.slane %v142, 2
  %v144 = vadd.f32 %v142, %v143
  %v145 = vrot.slane %v144, 1
  %v146 = vadd.f32 %v144, %v145
  %v147 = vsel %vm76, %v49, 0.0
  %v148 = vrot.slane %v147, 4
  %v149 = vadd.f32 %v147, %v148
  %v150 = vrot.slane %v149, 2
  %v151 = vadd.f32 %v149, %v150
  %v152 = vrot.slane %v151, 1
  %v153 = vadd.f32 %v151, %v152
  %v154 = vsel %vm76, %v65, 0.0
  %v155 = vrot.slane %v154, 4
  %v156 = vadd.f32 %v154, %v155
  %v157 = vrot.slane %v156, 2
  %v158 = vadd.f32 %v156, %v157
  %v159 = vrot.slane %v158, 1
  %v160 = vadd.f32 %v158, %v159
  %v161 = vsel %vm76, %v50, 0.0
  %v162 = vrot.slane %v161, 4
  %v163 = vadd.f32 %v161, %v162
  %v164 = vrot.slane %v163, 2
  %v165 = vadd.f32 %v163, %v164
  %v166 = vrot.slane %v165, 1
  %v167 = vadd.f32 %v165, %v166
  %v168 = vsel %vm76, %v66, 0.0
  %v169 = vrot.slane %v168, 4
  %v170 = vadd.f32 %v168, %v169
  %v171 = vrot.slane %v170, 2
  %v172 = vadd.f32 %v170, %v171
  %v173 = vrot.slane %v172, 1
  %v174 = vadd.f32 %v172, %v173
  %v175 = vsel %vm76, %v51, 0.0
  %v176 = vrot.slane %v175, 4
  %v177 = vadd.f32 %v175, %v176
  %v178 = vrot.slane %v177, 2
  %v179 = vadd.f32 %v177, %v178
  %v180 = vrot.slane %v179, 1
  %v181 = vadd.f32 %v179, %v180
  %v182 = vsel %vm76, %v67, 0.0
  %v183 = vrot.slane %v182, 4
  %v184 = vadd.f32 %v182, %v183
  %v185 = vrot.slane %v184, 2
  %v186 = vadd.f32 %v184, %v185
  %v187 = vrot.slane %v186, 1
  %v188 = vadd.f32 %v186, %v187
  %v189 = vld [vmem:[%s2] sm:$0xff]
  %v190 = vunpack.c.l.bf16 %v189
  %v191 = vunpack.c.h.bf16 %v189
  %v192 = vld [vmem:[#allocation2] sm:$0x3]
  %v195 = vlaneseq
  %v196 = vshrl.u32 %v195, 7
  %v197 = vsub.s32 0, %v196
  %v198 = vrot.slane %v190, %v197
  %v199 = vlaneseq
  %v200 = vshrl.u32 %v199, 7
  %v201 = vsub.s32 2, %v200
  %v202 = vrot.slane %v190, %v201
  %v203 = vlaneseq
  %v204 = vshrl.u32 %v203, 7
  %v205 = vsub.s32 4, %v204
  %v206 = vrot.slane %v190, %v205
  %v207 = vlaneseq
  %v208 = vshrl.u32 %v207, 7
  %v209 = vsub.s32 6, %v208
  %v210 = vrot.slane %v190, %v209
  %v211 = vlaneseq
  %v212 = vshrl.u32 %v211, 7
  %v213 = vsub.s32 0, %v212
  %v214 = vrot.slane %v191, %v213
  %v215 = vlaneseq
  %v216 = vshrl.u32 %v215, 7
  %v217 = vsub.s32 2, %v216
  %v218 = vrot.slane %v191, %v217
  %v219 = vlaneseq
  %v220 = vshrl.u32 %v219, 7
  %v221 = vsub.s32 4, %v220
  %v222 = vrot.slane %v191, %v221
  %v223 = vlaneseq
  %v224 = vshrl.u32 %v223, 7
  %v225 = vsub.s32 6, %v224
  %v226 = vrot.slane %v191, %v225
  %v235 = vlaneseq
  %v236 = vshrl.u32 %v235, 7
  %v237 = vsub.s32 0, %v236
  %v238 = vrot.slane %v198, %v237
  %v239 = vlaneseq
  %v240 = vshrl.u32 %v239, 7
  %v241 = vsub.s32 0, %v240
  %v242 = vrot.slane %v202, %v241
  %v243 = vlaneseq
  %v244 = vshrl.u32 %v243, 7
  %v245 = vsub.s32 0, %v244
  %v246 = vrot.slane %v206, %v245
  %v247 = vlaneseq
  %v248 = vshrl.u32 %v247, 7
  %v249 = vsub.s32 0, %v248
  %v250 = vrot.slane %v210, %v249
  %v251 = vlaneseq
  %v252 = vshrl.u32 %v251, 7
  %v253 = vsub.s32 0, %v252
  %v254 = vrot.slane %v214, %v253
  %v255 = vlaneseq
  %v256 = vshrl.u32 %v255, 7
  %v257 = vsub.s32 0, %v256
  %v258 = vrot.slane %v218, %v257
  %v259 = vlaneseq
  %v260 = vshrl.u32 %v259, 7
  %v261 = vsub.s32 0, %v260
  %v262 = vrot.slane %v222, %v261
  %v263 = vlaneseq
  %v264 = vshrl.u32 %v263, 7
  %v265 = vsub.s32 0, %v264
  %v266 = vrot.slane %v226, %v265
  %v267 = vmul.f32 %v83, %v238
  %v268 = vmul.f32 %v90, %v242
  %v269 = vmul.f32 %v97, %v246
  %v270 = vmul.f32 %v104, %v250
  %v271 = vmul.f32 %v111, %v254
  %v272 = vmul.f32 %v118, %v258
  %v273 = vmul.f32 %v125, %v262
  %v274 = vmul.f32 %v132, %v266
  %v275 = vmul.f32 %v139, %v238
  %v276 = vmul.f32 %v146, %v242
  %v277 = vmul.f32 %v153, %v246
  %v278 = vmul.f32 %v160, %v250
  %v279 = vmul.f32 %v167, %v254
  %v280 = vmul.f32 %v174, %v258
  %v281 = vmul.f32 %v181, %v262
  %v282 = vmul.f32 %v188, %v266
  %v299 = vrot.slane %v275, 7
  %vm300 = vcmask 1041409
  %v301 = vsel %vm300, %v299, %v267
  %v302 = vrot.slane %v276, 7
  %v303 = vsel %vm300, %v302, %v268
  %v304 = vrot.slane %v277, 7
  %v305 = vsel %vm300, %v304, %v269
  %v306 = vrot.slane %v278, 7
  %v307 = vsel %vm300, %v306, %v270
  %v308 = vrot.slane %v279, 7
  %v309 = vsel %vm300, %v308, %v271
  %v310 = vrot.slane %v280, 7
  %v311 = vsel %vm300, %v310, %v272
  %v312 = vrot.slane %v281, 7
  %v313 = vsel %vm300, %v312, %v273
  %v314 = vrot.slane %v282, 7
  %v315 = vsel %vm300, %v314, %v274
  %vm324 = vcmask 1041408
  %v325 = vsel %vm324, %v301, 0.0
  %v326 = vsel %vm324, %v303, 0.0
  %v327 = vadd.f32 %v325, %v326
  %v328 = vsel %vm324, %v305, 0.0
  %v329 = vadd.f32 %v327, %v328
  %v330 = vsel %vm324, %v307, 0.0
  %v331 = vadd.f32 %v329, %v330
  %v332 = vsel %vm324, %v309, 0.0
  %v333 = vadd.f32 %v331, %v332
  %v334 = vsel %vm324, %v311, 0.0
  %v335 = vadd.f32 %v333, %v334
  %v336 = vsel %vm324, %v313, 0.0
  %v337 = vadd.f32 %v335, %v336
  %v338 = vsel %vm324, %v315, 0.0
  %v339 = vadd.f32 %v337, %v338
  %340 = vadd.xlane.f32.xlu0 %v339
  %v341 = vpop.xlane.xlu0 %340
  %v342 = vadd.f32 %v192, %v341
  %vm343 = vcmask 1024
  %344 = vst.msk [vmem:[#allocation2] sm:$0x3] %vm343, %v342
  // Predicated region
  $region18: #{tpu_custom_call.1} parent=0 // pred_check
    %p345 = pneg %p14
  $region19: #{tpu_custom_call.1} parent=0 // pred_check_branch
    %347 = sbr.rel (%p345) target = $region21
  $region20: #{tpu_custom_call.1} parent=0 // pred_region
    %v348 = vld [vmem:[#allocation2] sm:$0x3]
    %v349 = vmul.f32 %v348, 0.33333334
    %350 = vst.msk [vmem:[%s3] sm:$0x3] %vm343, %v349
  $region21: #{tpu_custom_call.1} parent=0 // pred_fallthru
    _
  // Predicated region
  $region22: #{tpu_custom_call.1} parent=0 // pred_check
    _
  $region23: #{tpu_custom_call.1} parent=0 // pred_check_branch
    %352 = sbr.rel (0) target = $region25
  $region24: #{tpu_custom_call.1} parent=0 // pred_region
    _
  $region25: #{tpu_custom_call.1} parent=0 // pred_fallthru
    _
  // Predicated region
  $region26: #{tpu_custom_call.1} parent=0 // pred_check
    _
  $region27: #{tpu_custom_call.1} parent=0 // pred_check_branch
    %354 = sbr.rel (0) target = $region29
  $region28: #{tpu_custom_call.1} parent=0 // pred_region
    _
  $region29: #{tpu_custom_call.1} parent=0 // pred_fallthru
    _

</llo_original>
